<compile_context>
chip_gen: v7x
topology: tpu7x:2x2x1
jax: 0.10.0
libtpu: 0.0.40
codegen_flags: <defaults>
</compile_context>

<pallas_src>
import functools

import jax
import jax.numpy as jnp
from jax.experimental import pallas as pl
from jax.experimental.pallas import tpu as pltpu


def _round_up(x: int, m: int) -> int:
    return (x + m - 1) // m * m


def _quaternion_loss_kernel(q1_ref, q2_ref, out_ref, *, inv_n: float):
    i = pl.program_id(0)

    @pl.when(i == 0)
    def _init():
        out_ref[...] = jnp.zeros_like(out_ref)

    q1 = q1_ref[...]                                    # (4, TN) f32
    q2 = q2_ref[...]                                    # (4, TN) f32
    d = jnp.sum(q1 * q2, axis=0, keepdims=True)         # (1, TN) row-wise vdot
    # Partial sum of d^2 over this tile; padded lanes are zero -> contribute 0.
    out_ref[...] += jnp.sum(d * d, axis=1, keepdims=True)   # (1, 1) accumulator

    @pl.when(i == pl.num_programs(0) - 1)
    def _finalize():
        out_ref[...] = 1.0 - out_ref[...] * inv_n


def quaternion_loss(q1: jax.Array, q2: jax.Array, *, tile_n: int = 32768) -> jax.Array:
    """Pallas TPU implementation of QuaternionLoss.forward. Returns a scalar."""
    assert q1.shape == q2.shape and q1.ndim == 2 and q1.shape[1] == 4
    n = q1.shape[0]

    if q1.dtype != jnp.float32:
        q1 = q1.astype(jnp.float32)
    if q2.dtype != jnp.float32:
        q2 = q2.astype(jnp.float32)

    # Lane-dense layout: (4, N) -- components on sublanes, rows on lanes.
    q1t = q1.T
    q2t = q2.T

    # Lane tile: multiple of 128, no larger than (padded) N or tile_n.
    tn = _round_up(min(max(tile_n, 128), _round_up(n, 128)), 128)
    n_pad = _round_up(n, tn)
    if n_pad != n:
        pad = n_pad - n
        q1t = jnp.pad(q1t, ((0, 0), (0, pad)))
        q2t = jnp.pad(q2t, ((0, 0), (0, pad)))

    grid = (n_pad // tn,)
    kernel = functools.partial(_quaternion_loss_kernel, inv_n=1.0 / float(n))

    out = pl.pallas_call(
        kernel,
        out_shape=jax.ShapeDtypeStruct((1, 1), jnp.float32),
        grid=grid,
        in_specs=[
            pl.BlockSpec((4, tn), lambda i: (0, i)),
            pl.BlockSpec((4, tn), lambda i: (0, i)),
        ],
        out_specs=pl.BlockSpec((1, 1), lambda i: (0, 0)),
        compiler_params=pltpu.CompilerParams(
            dimension_semantics=("arbitrary",),
        ),
    )(q1t, q2t)
    return out[0, 0]


if __name__ == "__main__":
    key = jax.random.PRNGKey(0)
    k1, k2 = jax.random.split(key)
    N = 200  # small and ragged (not a multiple of 128) to exercise padding
    q1 = jax.random.normal(k1, (N, 4), dtype=jnp.float32)
    q2 = jax.random.normal(k2, (N, 4), dtype=jnp.float32)
    q1 = q1 / jnp.linalg.norm(q1, axis=1, keepdims=True)
    q2 = q2 / jnp.linalg.norm(q2, axis=1, keepdims=True)

    # Pure-JAX reference.
    ref = jnp.mean(1.0 - jnp.sum(q1 * q2, axis=1) ** 2)

    # Default path (single wide tile) and multi-step accumulator path.
    loss = quaternion_loss(q1, q2)
    loss_tiled = quaternion_loss(q1, q2, tile_n=128)
    jax.block_until_ready((loss, loss_tiled))

    assert jnp.allclose(loss, ref, atol=1e-5, rtol=1e-5), (loss, ref)
    assert jnp.allclose(loss_tiled, ref, atol=1e-5, rtol=1e-5), (loss_tiled, ref)

    print("KERNEL_OK")
</pallas_src>

<mosaic_0001>
module attributes {stable_mosaic.version = 11 : i64} {
  func.func @_quaternion_loss_kernel(%arg0: i32, %arg1: memref<4x256xf32, #tpu.memory_space<vmem>>, %arg2: memref<4x256xf32, #tpu.memory_space<vmem>>, %arg3: memref<1x1xf32, #tpu.memory_space<vmem>>) attributes {dimension_semantics = [#tpu.dimension_semantics<arbitrary>], iteration_bounds = array<i64: 1>, scalar_prefetch = 0 : i64, scratch_operands = 0 : i64, tpu.core_type = #tpu.core_type<tc>, window_params = [{transform_indices = @transform_0, window_bounds = array<i64: 4, 256>}, {transform_indices = @transform_1, window_bounds = array<i64: 4, 256>}, {pipeline_mode = #tpu.pipeline_mode<synchronous>, transform_indices = @transform_2, window_bounds = array<i64: 1, 1>}]} {
    %c0_i32 = arith.constant 0 : i32
    %0 = arith.cmpi eq, %arg0, %c0_i32 : i32
    %1 = arith.extui %0 : i1 to i32
    %c0_i32_0 = arith.constant 0 : i32
    %2 = arith.cmpi ne, %1, %c0_i32_0 : i32
    scf.if %2 {
      %cst_11 = arith.constant 0.000000e+00 : f32
      %17 = vector.broadcast %cst_11 : f32 to vector<1x1xf32>
      %c0_12 = arith.constant 0 : index
      %c0_13 = arith.constant 0 : index
      %18 = vector.load %arg3[%c0_12, %c0_13] : memref<1x1xf32, #tpu.memory_space<vmem>>, vector<1x1xf32>
      tpu.vector_store %arg3[%c0_12, %c0_13], %17 {strides = array<i32>} : memref<1x1xf32, #tpu.memory_space<vmem>>, vector<1x1xf32>,
    } else {
    }
    %c0 = arith.constant 0 : index
    %c0_1 = arith.constant 0 : index
    %3 = vector.load %arg1[%c0, %c0_1] : memref<4x256xf32, #tpu.memory_space<vmem>>, vector<4x256xf32>
    %c0_2 = arith.constant 0 : index
    %c0_3 = arith.constant 0 : index
    %4 = vector.load %arg2[%c0_2, %c0_3] : memref<4x256xf32, #tpu.memory_space<vmem>>, vector<4x256xf32>
    %5 = arith.mulf %3, %4 : vector<4x256xf32>
    %cst = arith.constant dense<0.000000e+00> : vector<256xf32>
    %6 = vector.multi_reduction <add>, %5, %cst [0] : vector<4x256xf32> to vector<256xf32>
    %7 = vector.shape_cast %6 : vector<256xf32> to vector<1x256xf32>
    %c0_4 = arith.constant 0 : index
    %c0_5 = arith.constant 0 : index
    %8 = vector.load %arg3[%c0_4, %c0_5] : memref<1x1xf32, #tpu.memory_space<vmem>>, vector<1x1xf32>
    %9 = arith.mulf %7, %7 : vector<1x256xf32>
    %cst_6 = arith.constant dense<0.000000e+00> : vector<1xf32>
    %10 = vector.multi_reduction <add>, %9, %cst_6 [1] : vector<1x256xf32> to vector<1xf32>
    %11 = vector.shape_cast %10 : vector<1xf32> to vector<1x1xf32>
    %12 = arith.addf %8, %11 : vector<1x1xf32>
    %c0_7 = arith.constant 0 : index
    %c0_8 = arith.constant 0 : index
    %13 = vector.load %arg3[%c0_7, %c0_8] : memref<1x1xf32, #tpu.memory_space<vmem>>, vector<1x1xf32>
    tpu.vector_store %arg3[%c0_7, %c0_8], %12 {strides = array<i32>} : memref<1x1xf32, #tpu.memory_space<vmem>>, vector<1x1xf32>,
    %c0_i32_9 = arith.constant 0 : i32
    %14 = arith.cmpi eq, %arg0, %c0_i32_9 : i32
    %15 = arith.extui %14 : i1 to i32
    %c0_i32_10 = arith.constant 0 : i32
    %16 = arith.cmpi ne, %15, %c0_i32_10 : i32
    scf.if %16 {
      %c0_11 = arith.constant 0 : index
      %c0_12 = arith.constant 0 : index
      %17 = vector.load %arg3[%c0_11, %c0_12] : memref<1x1xf32, #tpu.memory_space<vmem>>, vector<1x1xf32>
      %cst_13 = arith.constant 5.000000e-03 : f32
      %18 = vector.broadcast %cst_13 : f32 to vector<1x1xf32>
      %19 = arith.mulf %17, %18 : vector<1x1xf32>
      %cst_14 = arith.constant 1.000000e+00 : f32
      %20 = vector.broadcast %cst_14 : f32 to vector<1x1xf32>
      %21 = arith.subf %20, %19 : vector<1x1xf32>
      %c0_15 = arith.constant 0 : index
      %c0_16 = arith.constant 0 : index
      %22 = vector.load %arg3[%c0_15, %c0_16] : memref<1x1xf32, #tpu.memory_space<vmem>>, vector<1x1xf32>
      tpu.vector_store %arg3[%c0_15, %c0_16], %21 {strides = array<i32>} : memref<1x1xf32, #tpu.memory_space<vmem>>, vector<1x1xf32>,
    } else {
    }
    return
  }
  func.func @transform_0(%arg0: i32) -> (i32, i32) {
    %c0_i32 = arith.constant 0 : i32
    %c0_i32_0 = arith.constant 0 : i32
    return %c0_i32, %arg0 : i32, i32
  }
  func.func @transform_1(%arg0: i32) -> (i32, i32) {
    %c0_i32 = arith.constant 0 : i32
    %c0_i32_0 = arith.constant 0 : i32
    return %c0_i32, %arg0 : i32, i32
  }
  func.func @transform_2(%arg0: i32) -> (i32, i32) {
    %c0_i32 = arith.constant 0 : i32
    %c0_i32_0 = arith.constant 0 : i32
    %c0_i32_1 = arith.constant 0 : i32
    return %c0_i32, %c0_i32_0 : i32, i32
  }
}

</mosaic_0001>

<llo_original>
// kernel: tpu_custom_call.1
$region0: #{tpu_custom_call.1}
  #allocation0 [shape = 'u32[]', space=smem, size = 0x4, offset = 0x4, fixed_abs, tag = 'smem constant byte address 0x4 - core index']
  #allocation1 [shape = 'u32[144,128]{1,0:T(1,128)}', space=vmem, size = 0x12000, scoped, tag = 'internal scratch']
  %s0 = inlined_call_operand.hbm [shape: f32[4,256], index: 0, kind: input, shape index: {}]
  %s1 = inlined_call_operand.hbm [shape: f32[4,256], index: 1, kind: input, shape index: {}]
  %s2 = inlined_call_operand.hbm [shape: f32[1,1], index: 2, kind: output, shape index: {}]
  %s3 = sld [smem:[#allocation0]]
  $region34: #{tpu_custom_call.1} parent=0
    _
  %s5 = ssub.s32 1, %s3
  %s6 = scalar_select 0, %s5, %s3
  $region1: #{tpu_custom_call.1} parent=0
    #allocation2 [shape = 'u8[4096]{0}', space=vmem, size = 0x1000, scoped, tag = 'input window, operand 0, single buffered']
    #allocation3 [shape = 's32[1]{0}', space=sflag, size = 0x4, scoped, tag = 'scoped memory for tpu_custom_call.1']
    #allocation4 [shape = 's32[1]{0}', space=sflag, size = 0x4, scoped, tag = 'scoped memory for tpu_custom_call.1']
    #allocation5 [shape = 'u8[4096]{0}', space=vmem, size = 0x1000, scoped, tag = 'input window, operand 1, single buffered']
    #allocation6 [shape = 's32[1]{0}', space=sflag, size = 0x4, scoped, tag = 'scoped memory for tpu_custom_call.1']
    #allocation7 [shape = 'u8[512]{0}', space=vmem, size = 0x400, scoped, tag = 'output window, operand 0, single buffered']
    %7 = vsyncpa [#allocation3], 0
    %8 = vsyncpa [#allocation6], 0
    %9 = vsyncpa [#allocation4], 0
    // Predicated region
    $region2: #{tpu_custom_call.1} parent=1 // pred_check
      _
    $region3: #{tpu_custom_call.1} parent=1 // pred_check_branch
      %11 = sbr.rel (0) target = $region5
    $region4: #{tpu_custom_call.1} parent=1 // pred_region
      %s13 = ssub.s32 128, 128
      %14 = vsyncadd [#allocation3], %s13
      %s16 = sshll.u32 [#allocation2], 4
      %s17 = int_to_ptr.vmem [resolvable:$true] %s16
      %19 = dma.hbm_to_vmem [thread:$0]  %s0, 128, %s17, [#allocation3]
    $region5: #{tpu_custom_call.1} parent=1 // pred_fallthru
      _
    // Predicated region
    $region6: #{tpu_custom_call.1} parent=1 // pred_check
      _
    $region7: #{tpu_custom_call.1} parent=1 // pred_check_branch
      %21 = sbr.rel (0) target = $region9
    $region8: #{tpu_custom_call.1} parent=1 // pred_region
      %s23 = ssub.s32 128, 128
      %24 = vsyncadd [#allocation6], %s23
      %s26 = sshll.u32 [#allocation5], 4
      %s27 = int_to_ptr.vmem [resolvable:$true] %s26
      %29 = dma.hbm_to_vmem [thread:$0]  %s1, 128, %s27, [#allocation6]
    $region9: #{tpu_custom_call.1} parent=1 // pred_fallthru
      _
    // Predicated region
    $region10: #{tpu_custom_call.1} parent=1 // pred_check
      _
    $region11: #{tpu_custom_call.1} parent=1 // pred_check_branch
      %31 = sbr.rel (0) target = $region13
    $region12: #{tpu_custom_call.1} parent=1 // pred_region
      %32 = dma.done [#allocation3], 128
    $region13: #{tpu_custom_call.1} parent=1 // pred_fallthru
      _
    // Predicated region
    $region14: #{tpu_custom_call.1} parent=1 // pred_check
      _
    $region15: #{tpu_custom_call.1} parent=1 // pred_check_branch
      %34 = sbr.rel (0) target = $region17
    $region16: #{tpu_custom_call.1} parent=1 // pred_region
      %35 = dma.done [#allocation6], 128
    $region17: #{tpu_custom_call.1} parent=1 // pred_fallthru
      _
    %p36 = scmp.eq.s32.totalorder 0, 0
    // Predicated region
    $region18: #{tpu_custom_call.1} parent=1 // pred_check
      %p37 = pneg %p36
    $region19: #{tpu_custom_call.1} parent=1 // pred_check_branch
      %39 = sbr.rel (%p37) target = $region21
    $region20: #{tpu_custom_call.1} parent=1 // pred_region
      %vm40 = vcmask 0
      %41 = vst.msk [vmem:[#allocation7] sm:$0x1] %vm40, 0.0
    $region21: #{tpu_custom_call.1} parent=1 // pred_fallthru
      _
    %v42 = vld [vmem:[#allocation2] sm:$0xff]
    %v43 = vld [vmem:[#allocation5] sm:$0xff]
    %v44 = vmul.f32 %v42, %v43
    %v46 = vcombine.high %v44, %v44
    %vm48 = vcmask 1043456
    %v49 = vsel %vm48, %v44, 0.0
    %v50 = vrot.slane %v49, 4
    %v51 = vadd.f32 %v49, %v50
    %v52 = vrot.slane %v51, 2
    %v53 = vadd.f32 %v51, %v52
    %v54 = vrot.slane %v53, 1
    %v55 = vadd.f32 %v53, %v54
    %v56 = vsel %vm48, %v46, 0.0
    %v57 = vrot.slane %v56, 4
    %v58 = vadd.f32 %v56, %v57
    %v59 = vrot.slane %v58, 2
    %v60 = vadd.f32 %v58, %v59
    %v61 = vrot.slane %v60, 1
    %v62 = vadd.f32 %v60, %v61
    %v63 = vld [vmem:[#allocation7] sm:$0x1]
    %v64 = vmul.f32 %v55, %v55
    %v65 = vmul.f32 %v62, %v62
    %v66 = vadd.f32 %v64, %v65
    %67 = vadd.xlane.f32.xlu0 %v66
    %v68 = vpop.xlane.xlu0 %67
    %v69 = vadd.f32 %v63, %v68
    %vm70 = vcmask 0
    %71 = vst.msk [vmem:[#allocation7] sm:$0x1] %vm70, %v69
    // Predicated region
    $region22: #{tpu_custom_call.1} parent=1 // pred_check
      %p72 = pneg %p36
    $region23: #{tpu_custom_call.1} parent=1 // pred_check_branch
      %74 = sbr.rel (%p72) target = $region25
    $region24: #{tpu_custom_call.1} parent=1 // pred_region
      %v75 = vld [vmem:[#allocation7] sm:$0x1]
      %v76 = vmul.f32 %v75, 0.005
      %v77 = vsub.f32 1.0, %v76
      %78 = vst.msk [vmem:[#allocation7] sm:$0x1] %vm70, %v77
    $region25: #{tpu_custom_call.1} parent=1 // pred_fallthru
      _
    // Predicated region
    $region26: #{tpu_custom_call.1} parent=1 // pred_check
      _
    $region27: #{tpu_custom_call.1} parent=1 // pred_check_branch
      %80 = sbr.rel (0) target = $region29
    $region28: #{tpu_custom_call.1} parent=1 // pred_region
      %s82 = ssub.s32 16, 16
      %83 = vsyncadd [#allocation4], %s82
      %s85 = sshll.u32 [#allocation7], 4
      %s86 = int_to_ptr.vmem [resolvable:$true] %s85
      %88 = dma.vmem_to_hbm [thread:$0]  %s86, 16, %s2, [#allocation4]
    $region29: #{tpu_custom_call.1} parent=1 // pred_fallthru
      _
    // Predicated region
    $region30: #{tpu_custom_call.1} parent=1 // pred_check
      _
    $region31: #{tpu_custom_call.1} parent=1 // pred_check_branch
      %90 = sbr.rel (0) target = $region33
    $region32: #{tpu_custom_call.1} parent=1 // pred_region
      %91 = dma.done [#allocation4], 16
    $region33: #{tpu_custom_call.1} parent=1 // pred_fallthru
      _
    %92 = vsyncpa [#allocation3], 1
    %93 = vsyncpa [#allocation6], 1
    %94 = vsyncpa [#allocation4], 1

</llo_original>
